<compile_context>
chip_gen: v5e
topology: v5e:2x2
jax: 0.10.0
libtpu: 0.0.40
codegen_flags: <defaults>
</compile_context>

<pallas_src>
import functools
import math

import jax
import jax.numpy as jnp
from jax.experimental import pallas as pl
from jax.experimental.pallas import tpu as pltpu


_TARGET_BLOCK_BYTES = 1 << 20  # ~1 MiB per array per block (safe on v5e/v6e/v7x)

# TODO(synk): only the common ACT2FN entries (silu/swish, gelu, gelu_tanh,
# relu, sigmoid) are implemented; other ACT2FN names raise ValueError.
_TRANSCENDENTAL_ACTS = ("silu", "swish", "gelu", "gelu_new", "gelu_pytorch_tanh", "sigmoid")


def _apply_activation(x, activation: str):
    """Activation on an f32 value inside the kernel."""
    if activation in ("silu", "swish"):
        # x * sigmoid(x); the divide lands in the EUP slot (approx reciprocal),
        # which is effectively free under an HBM-bound roofline.
        return x * pl.reciprocal(1.0 + jnp.exp(-x), approx=True)
    elif activation == "gelu":
        return jax.nn.gelu(x, approximate=False)
    elif activation in ("gelu_new", "gelu_pytorch_tanh"):
        return jax.nn.gelu(x, approximate=True)
    elif activation == "relu":
        return jnp.maximum(x, 0.0)
    elif activation == "sigmoid":
        return pl.reciprocal(1.0 + jnp.exp(-x), approx=True)
    else:
        raise ValueError(f"unsupported activation: {activation}")


def _glu_kernel(gate_ref, value_ref, out_ref, *, activation: str):
    g = gate_ref[...].astype(jnp.float32)
    v = value_ref[...].astype(jnp.float32)
    out_ref[...] = (_apply_activation(g, activation) * v).astype(out_ref.dtype)


def _sublane_multiple(itemsize: int) -> int:
    # 8 for 4-byte dtypes, 16 for 2-byte, 32 for 1-byte (sub-32-bit packing).
    return max(8, 32 // itemsize)


def _plan_layout(total: int, itemsize: int):
    """Pick a lane-dense (rows, lanes) view plus a byte-budgeted row tile."""
    # Lane count: widest multiple of 128 dividing the element count; otherwise
    # pad up to a multiple of 128.
    for lanes in (1024, 512, 256, 128):
        if total % lanes == 0:
            padded = total
            break
    else:
        lanes = 128
        padded = ((total + lanes - 1) // lanes) * lanes
    rows = padded // lanes

    sub = _sublane_multiple(itemsize)
    budget_rows = max(sub, (_TARGET_BLOCK_BYTES // (lanes * itemsize)) // sub * sub)
    tile_rows = min(rows, budget_rows)

    if tile_rows >= rows:
        if rows >= 2 * sub:
            # Split into >= 2 grid steps so both v7x TensorCores get work.
            tile_rows = ((rows + 1) // 2 + sub - 1) // sub * sub
        else:
            tile_rows = rows  # single full-extent block (allowed by Pallas)

    return lanes, rows, padded, tile_rows


def glu(gate: jax.Array, value: jax.Array, activation: str = "silu") -> jax.Array:
    """activation(gate) * value, elementwise, as a Pallas TPU kernel."""
    assert gate.shape == value.shape, (gate.shape, value.shape)
    assert gate.dtype == value.dtype, (gate.dtype, value.dtype)
    orig_shape = gate.shape

    total = math.prod(orig_shape) if orig_shape else 1
    itemsize = jnp.dtype(gate.dtype).itemsize
    lanes, rows, padded, tile_rows = _plan_layout(total, itemsize)

    g_flat = gate.reshape(-1)
    v_flat = value.reshape(-1)
    if padded != total:
        g_flat = jnp.pad(g_flat, (0, padded - total))
        v_flat = jnp.pad(v_flat, (0, padded - total))
    g2d = g_flat.reshape(rows, lanes)
    v2d = v_flat.reshape(rows, lanes)

    grid = (pl.cdiv(rows, tile_rows),)

    # Explicit scoped-VMEM budget: (2 inputs + 1 output) x double buffering.
    block_bytes = tile_rows * lanes * itemsize
    needed = 3 * 2 * block_bytes
    vmem_limit = int(min(48 * 1024 * 1024, max(2 * needed, 16 * 1024 * 1024)))

    cost = pl.CostEstimate(
        flops=6 * total,
        transcendentals=(2 * total) if activation in _TRANSCENDENTAL_ACTS else 0,
        bytes_accessed=3 * total * itemsize,
    )

    out2d = pl.pallas_call(
        functools.partial(_glu_kernel, activation=activation),
        out_shape=jax.ShapeDtypeStruct((rows, lanes), gate.dtype),
        grid_spec=pltpu.PrefetchScalarGridSpec(
            num_scalar_prefetch=0,
            grid=grid,
            in_specs=[
                pl.BlockSpec((tile_rows, lanes), lambda i: (i, 0)),
                pl.BlockSpec((tile_rows, lanes), lambda i: (i, 0)),
            ],
            out_specs=pl.BlockSpec((tile_rows, lanes), lambda i: (i, 0)),
        ),
        compiler_params=pltpu.CompilerParams(
            dimension_semantics=("parallel",),
            vmem_limit_bytes=vmem_limit,
        ),
        cost_estimate=cost,
    )(g2d, v2d)

    out_flat = out2d.reshape(-1)
    if padded != total:
        out_flat = out_flat[:total]
    return out_flat.reshape(orig_shape)


def _ref_glu(gate, value, activation):
    """Pure-JAX reference (matches the PyTorch module semantics)."""
    if activation in ("silu", "swish"):
        return jax.nn.silu(gate) * value
    if activation == "gelu":
        return jax.nn.gelu(gate, approximate=False) * value
    if activation in ("gelu_new", "gelu_pytorch_tanh"):
        return jax.nn.gelu(gate, approximate=True) * value
    if activation == "relu":
        return jnp.maximum(gate, 0.0) * value
    if activation == "sigmoid":
        return jax.nn.sigmoid(gate) * value
    raise ValueError(activation)


if __name__ == "__main__":
    key = jax.random.PRNGKey(0)

    # Test 1: shapes implied by the forward — two same-shaped activation
    # tensors, e.g. (batch=2, seq=8, hidden=32), silu activation.
    k1, k2, k3, k4 = jax.random.split(key, 4)
    B, S, H = 2, 8, 32
    gate = jax.random.normal(k1, (B, S, H), dtype=jnp.float32)
    value = jax.random.normal(k2, (B, S, H), dtype=jnp.float32)
    out = jax.block_until_ready(glu(gate, value, activation="silu"))
    ref = _ref_glu(gate, value, "silu")
    assert out.shape == ref.shape and out.dtype == ref.dtype
    # Tolerance accounts for the EUP approx reciprocal inside the kernel.
    assert jnp.allclose(out, ref, atol=1e-2, rtol=1e-2), float(jnp.max(jnp.abs(out - ref)))

    # Test 2: a shape whose element count is not a multiple of 128 (exercises
    # the zero-pad path of the lane-dense flattening).
    gate2 = jax.random.normal(k3, (3, 5, 7), dtype=jnp.float32)
    value2 = jax.random.normal(k4, (3, 5, 7), dtype=jnp.float32)
    out2 = jax.block_until_ready(glu(gate2, value2, activation="silu"))
    ref2 = _ref_glu(gate2, value2, "silu")
    assert out2.shape == ref2.shape and out2.dtype == ref2.dtype
    assert jnp.allclose(out2, ref2, atol=1e-2, rtol=1e-2), float(jnp.max(jnp.abs(out2 - ref2)))

    print("KERNEL_OK")
</pallas_src>

<mosaic_0001>
module attributes {stable_mosaic.version = 11 : i64} {
  func.func @_glu_kernel(%arg0: i32, %arg1: memref<1x512xf32, #tpu.memory_space<vmem>>, %arg2: memref<1x512xf32, #tpu.memory_space<vmem>>, %arg3: memref<1x512xf32, #tpu.memory_space<vmem>>) attributes {dimension_semantics = [#tpu.dimension_semantics<parallel>], iteration_bounds = array<i64: 1>, scalar_prefetch = 0 : i64, scratch_operands = 0 : i64, tpu.core_type = #tpu.core_type<tc>, window_params = [{transform_indices = @transform_0, window_bounds = array<i64: 1, 512>}, {transform_indices = @transform_1, window_bounds = array<i64: 1, 512>}, {transform_indices = @transform_2, window_bounds = array<i64: 1, 512>}]} {
    %c0 = arith.constant 0 : index
    %c0_0 = arith.constant 0 : index
    %0 = vector.load %arg1[%c0, %c0_0] : memref<1x512xf32, #tpu.memory_space<vmem>>, vector<1x512xf32>
    %c0_1 = arith.constant 0 : index
    %c0_2 = arith.constant 0 : index
    %1 = vector.load %arg2[%c0_1, %c0_2] : memref<1x512xf32, #tpu.memory_space<vmem>>, vector<1x512xf32>
    %cst = arith.constant 0.000000e+00 : f32
    %2 = vector.broadcast %cst : f32 to vector<1x512xf32>
    %3 = arith.subf %2, %0 : vector<1x512xf32>
    %4 = math.exp %3 : vector<1x512xf32>
    %cst_3 = arith.constant 1.000000e+00 : f32
    %5 = vector.broadcast %cst_3 : f32 to vector<1x512xf32>
    %6 = arith.addf %5, %4 : vector<1x512xf32>
    %7 = tpu.reciprocal %6 {approx = true} : vector<1x512xf32> -> vector<1x512xf32>
    %8 = arith.mulf %0, %7 : vector<1x512xf32>
    %9 = arith.mulf %8, %1 : vector<1x512xf32>
    %c0_4 = arith.constant 0 : index
    %c0_5 = arith.constant 0 : index
    %10 = vector.load %arg3[%c0_4, %c0_5] : memref<1x512xf32, #tpu.memory_space<vmem>>, vector<1x512xf32>
    tpu.vector_store %arg3[%c0_4, %c0_5], %9 {strides = array<i32>} : memref<1x512xf32, #tpu.memory_space<vmem>>, vector<1x512xf32>,
    return
  }
  func.func @transform_0(%arg0: i32) -> (i32, i32) {
    %c0_i32 = arith.constant 0 : i32
    %c0_i32_0 = arith.constant 0 : i32
    return %arg0, %c0_i32 : i32, i32
  }
  func.func @transform_1(%arg0: i32) -> (i32, i32) {
    %c0_i32 = arith.constant 0 : i32
    %c0_i32_0 = arith.constant 0 : i32
    return %arg0, %c0_i32 : i32, i32
  }
  func.func @transform_2(%arg0: i32) -> (i32, i32) {
    %c0_i32 = arith.constant 0 : i32
    %c0_i32_0 = arith.constant 0 : i32
    return %arg0, %c0_i32 : i32, i32
  }
}

</mosaic_0001>

<llo_original>
// kernel: tpu_custom_call.1
$region0: #{tpu_custom_call.1}
  #allocation0 [shape = 'u32[]', space=smem, size = 0x4, offset = 0x4, fixed_abs, tag = 'smem constant byte address 0x4 - core index']
  #allocation1 [shape = 'u32[72,128]{1,0:T(1,128)}', space=vmem, size = 0x9000, scoped, tag = 'internal scratch']
  %s0 = inlined_call_operand.hbm [shape: f32[1,512], index: 0, kind: input, shape index: {}]
  %s1 = inlined_call_operand.hbm [shape: f32[1,512], index: 1, kind: input, shape index: {}]
  %s2 = inlined_call_operand.hbm [shape: f32[1,512], index: 2, kind: output, shape index: {}]
  %s3 = sld [smem:[#allocation0]]
  $region26: #{tpu_custom_call.1} parent=0
    _
  %s5 = ssub.s32 1, %s3
  %s6 = scalar_select 0, %s5, %s3
  $region1: #{tpu_custom_call.1} parent=0
    #allocation2 [shape = 'u8[2048]{0}', space=vmem, size = 0x800, scoped, tag = 'input window, operand 0, single buffered']
    #allocation3 [shape = 's32[1]{0}', space=sflag, size = 0x4, scoped, tag = 'scoped memory for tpu_custom_call.1']
    #allocation4 [shape = 's32[1]{0}', space=sflag, size = 0x4, scoped, tag = 'scoped memory for tpu_custom_call.1']
    #allocation5 [shape = 'u8[2048]{0}', space=vmem, size = 0x800, scoped, tag = 'input window, operand 1, single buffered']
    #allocation6 [shape = 's32[1]{0}', space=sflag, size = 0x4, scoped, tag = 'scoped memory for tpu_custom_call.1']
    #allocation7 [shape = 'u8[2048]{0}', space=vmem, size = 0x800, scoped, tag = 'output window, operand 0, single buffered']
    %7 = vsyncpa [#allocation3], 0
    %8 = vsyncpa [#allocation6], 0
    %9 = vsyncpa [#allocation4], 0
    // Predicated region
    $region2: #{tpu_custom_call.1} parent=1 // pred_check
      _
    $region3: #{tpu_custom_call.1} parent=1 // pred_check_branch
      %11 = sbr.rel (0) target = $region5
    $region4: #{tpu_custom_call.1} parent=1 // pred_region
      %13 = vsyncadd [#allocation3], 0
      %s15 = sshll.u32 %s0, 4
      %s16 = int_to_ptr.hbm [resolvable:$true] %s15
      %s17 = sshll.u32 [#allocation2], 4
      %s18 = int_to_ptr.vmem [resolvable:$true] %s17
      %20 = dma.hbm_to_vmem [thread:$0]  %s16, 64, %s18, [#allocation3]
    $region5: #{tpu_custom_call.1} parent=1 // pred_fallthru
      _
    // Predicated region
    $region6: #{tpu_custom_call.1} parent=1 // pred_check
      _
    $region7: #{tpu_custom_call.1} parent=1 // pred_check_branch
      %22 = sbr.rel (0) target = $region9
    $region8: #{tpu_custom_call.1} parent=1 // pred_region
      %24 = vsyncadd [#allocation6], 0
      %s26 = sshll.u32 %s1, 4
      %s27 = int_to_ptr.hbm [resolvable:$true] %s26
      %s28 = sshll.u32 [#allocation5], 4
      %s29 = int_to_ptr.vmem [resolvable:$true] %s28
      %31 = dma.hbm_to_vmem [thread:$0]  %s27, 64, %s29, [#allocation6]
    $region9: #{tpu_custom_call.1} parent=1 // pred_fallthru
      _
    // Predicated region
    $region10: #{tpu_custom_call.1} parent=1 // pred_check
      _
    $region11: #{tpu_custom_call.1} parent=1 // pred_check_branch
      %33 = sbr.rel (0) target = $region13
    $region12: #{tpu_custom_call.1} parent=1 // pred_region
      %35 = dma.done [#allocation3], 64
    $region13: #{tpu_custom_call.1} parent=1 // pred_fallthru
      _
    // Predicated region
    $region14: #{tpu_custom_call.1} parent=1 // pred_check
      _
    $region15: #{tpu_custom_call.1} parent=1 // pred_check_branch
      %37 = sbr.rel (0) target = $region17
    $region16: #{tpu_custom_call.1} parent=1 // pred_region
      %39 = dma.done [#allocation6], 64
    $region17: #{tpu_custom_call.1} parent=1 // pred_fallthru
      _
    %v40 = vld [vmem:[#allocation2] sm:$0xf]
    %v41 = vld [vmem:[#allocation5] sm:$0xf]
    %v42 = vsub.f32 0.0, %v40
    %v43 = vmul.f32 %v42, 1.442695
    %v44 = vpow.pop %v43
    %v45 = vadd.f32 %v44, 1.0
    %v46 = vrcp.pop %v45
    %v47 = vmul.f32 %v40, %v46
    %v48 = vmul.f32 %v47, %v41
    %v49 = vlaneseq
    %vm50 = vcmp.ge.s32.totalorder %v49, 0
    %vm51 = vcmp.lt.s32.totalorder %v49, 512
    %vm52 = vmand %vm50, %vm51
    %53 = vst.msk [vmem:[#allocation7] sm:$0xf] %vm52, %v48
    // Predicated region
    $region18: #{tpu_custom_call.1} parent=1 // pred_check
      _
    $region19: #{tpu_custom_call.1} parent=1 // pred_check_branch
      %55 = sbr.rel (0) target = $region21
    $region20: #{tpu_custom_call.1} parent=1 // pred_region
      %57 = vsyncadd [#allocation4], 0
      %s59 = sshll.u32 [#allocation7], 4
      %s60 = int_to_ptr.vmem [resolvable:$true] %s59
      %s61 = sshll.u32 %s2, 4
      %s62 = int_to_ptr.hbm [resolvable:$true] %s61
      %64 = dma.vmem_to_hbm [thread:$0]  %s60, 64, %s62, [#allocation4]
    $region21: #{tpu_custom_call.1} parent=1 // pred_fallthru
      _
    // Predicated region
    $region22: #{tpu_custom_call.1} parent=1 // pred_check
      _
    $region23: #{tpu_custom_call.1} parent=1 // pred_check_branch
      %66 = sbr.rel (0) target = $region25
    $region24: #{tpu_custom_call.1} parent=1 // pred_region
      %68 = dma.done [#allocation4], 64
    $region25: #{tpu_custom_call.1} parent=1 // pred_fallthru
      _
    %69 = vsyncpa [#allocation3], 1
    %70 = vsyncpa [#allocation6], 1
    %71 = vsyncpa [#allocation4], 1

</llo_original>
